<compile_context>
chip_gen: v5e
topology: v5e:2x2
jax: 0.10.0
libtpu: 0.0.40
codegen_flags: <defaults>
</compile_context>

<pallas_src>
import functools

import numpy as np
import jax
import jax.numpy as jnp
from jax.experimental import pallas as pl
from jax.experimental.pallas import tpu as pltpu

CLASS_NUM = 10
BN_EPS = 1e-5
VMEM_LIMIT = 32 * 1024 * 1024


# ----------------------------- small helpers ------------------------------

def _round_up(x, m):
    return ((x + m - 1) // m) * m


def _pick_tk(k_pad, n_pad):
    """Pick a K tile (multiple of 128, divides k_pad, bounded so the (tk, N)
    weight block stays ~<=2 MiB in bf16)."""
    cap = min(2048, max(128, ((1 << 20) // n_pad) // 128 * 128))
    if k_pad <= cap:
        return k_pad
    for cand in (2048, 1792, 1536, 1280, 1024, 896, 768, 640, 512, 384, 256, 128):
        if cand <= cap and k_pad % cand == 0:
            return cand
    return 128


def _apply_act(y, act):
    if act == "relu":
        return jnp.maximum(y, 0.0)
    if act == "leaky_relu":
        return jnp.where(y > 0, y, 0.1 * y)
    return y


def bn_scale_shift(bn):
    s = bn["gamma"] / jnp.sqrt(bn["var"] + BN_EPS)
    t = bn["beta"] - bn["mean"] * s
    return s.reshape(1, -1), t.reshape(1, -1)


# ----------------------------- Pallas kernels -----------------------------

def _mm_affine_kernel(*refs, act, has_res):
    """(bm,tk)@(tk,N) accumulated over the K grid axis into a f32 VMEM scratch;
    epilogue = per-channel affine (folded BN / bias) [+ residual] + activation."""
    if has_res:
        a_ref, w_ref, s_ref, t_ref, r_ref, o_ref, acc_ref = refs
    else:
        a_ref, w_ref, s_ref, t_ref, o_ref, acc_ref = refs
        r_ref = None

    @pl.when(pl.program_id(1) == 0)
    def _():
        acc_ref[...] = jnp.zeros_like(acc_ref)

    acc_ref[...] += jnp.dot(a_ref[...], w_ref[...],
                            preferred_element_type=jnp.float32)

    @pl.when(pl.program_id(1) == pl.num_programs(1) - 1)
    def _():
        y = acc_ref[...] * s_ref[...] + t_ref[...]
        if r_ref is not None:
            y = y + r_ref[...].astype(jnp.float32)
        o_ref[...] = _apply_act(y, act).astype(o_ref.dtype)


def mm_affine(a, w, s, t, act="none", res=None, out_dtype=jnp.float32):
    """out = act((a @ w) * s + t [+ res]); a:(M,K) w:(K,N) s,t:(1,N) res:(M,N).

    A/W are cast to bf16 (f32 accumulation), M padded to the row tile, K and N
    zero-padded to multiples of 128 (lane-dense loads/stores); result sliced
    back to (M, N)."""
    M, K = a.shape
    K2, N = w.shape
    assert K == K2
    Kp = _round_up(K, 128)
    Np = _round_up(N, 128)
    bm = min(256, _round_up(M, 8))
    Mp = _round_up(M, bm)
    tk = _pick_tk(Kp, Np)

    ab = a.astype(jnp.bfloat16)
    if (Mp, Kp) != (M, K):
        ab = jnp.pad(ab, ((0, Mp - M), (0, Kp - K)))
    wb = w.astype(jnp.bfloat16)
    if (Kp, Np) != (K, N):
        wb = jnp.pad(wb, ((0, Kp - K), (0, Np - N)))
    sp = s if Np == N else jnp.pad(s, ((0, 0), (0, Np - N)))
    tp = t if Np == N else jnp.pad(t, ((0, 0), (0, Np - N)))

    args = [ab, wb, sp, tp]
    in_specs = [
        pl.BlockSpec((bm, tk), lambda i, k: (i, k)),
        pl.BlockSpec((tk, Np), lambda i, k: (k, 0)),
        pl.BlockSpec((1, Np), lambda i, k: (0, 0)),
        pl.BlockSpec((1, Np), lambda i, k: (0, 0)),
    ]
    has_res = res is not None
    res_bytes = 0
    if has_res:
        rp = res
        if rp.shape != (Mp, Np):
            rp = jnp.pad(rp, ((0, Mp - M), (0, Np - N)))
        args.append(rp)
        in_specs.append(pl.BlockSpec((bm, Np), lambda i, k: (i, 0)))
        res_bytes = Mp * Np * rp.dtype.itemsize

    out = pl.pallas_call(
        functools.partial(_mm_affine_kernel, act=act, has_res=has_res),
        grid=(Mp // bm, Kp // tk),
        in_specs=in_specs,
        out_specs=pl.BlockSpec((bm, Np), lambda i, k: (i, 0)),
        out_shape=jax.ShapeDtypeStruct((Mp, Np), out_dtype),
        scratch_shapes=[pltpu.VMEM((bm, Np), jnp.float32)],
        compiler_params=pltpu.CompilerParams(
            dimension_semantics=("parallel", "arbitrary"),
            vmem_limit_bytes=VMEM_LIMIT),
        cost_estimate=pl.CostEstimate(
            flops=2 * Mp * Kp * Np,
            transcendentals=0,
            bytes_accessed=(Mp * Kp + Kp * Np) * 2
                           + Mp * Np * jnp.dtype(out_dtype).itemsize + res_bytes),
    )(*args)
    if (Mp, Np) != (M, N):
        out = out[:M, :N]
    return out


def _conv3x3_s1_kernel(a_ref, w_ref, s_ref, t_ref, o_ref, *, wp, rows, act):
    # a_ref: (1, P_alloc, C) flattened zero-padded image; the 9 conv taps are
    # contiguous row-offset slabs -> 9 accumulated MXU matmuls, no im2col.
    acc = jnp.dot(a_ref[0, pl.ds(0, rows), :], w_ref[0],
                  preferred_element_type=jnp.float32)
    for tap in range(1, 9):
        off = (tap // 3) * wp + (tap % 3)
        acc = acc + jnp.dot(a_ref[0, pl.ds(off, rows), :], w_ref[tap],
                            preferred_element_type=jnp.float32)
    y = acc * s_ref[...] + t_ref[...]
    o_ref[0] = _apply_act(y, act).astype(o_ref.dtype)


def conv3x3_s1_bn_act(x, w, s, t, act, out_dtype):
    """3x3 / stride-1 / pad-1 conv + folded BN + activation, NHWC.

    The zero-padded activation is flattened to (N, Hp*Wp, C) bf16 and read ONCE
    by the kernel; the two wrap-around garbage columns per output row are
    stripped afterwards."""
    N, H, W, C = x.shape
    Co = w.shape[0]
    Hp, Wp = H + 2, W + 2
    rows = H * Wp                               # computed rows per image
    P = Hp * Wp
    P_alloc = _round_up(P + 2, 8)               # last tap reads up to row P+1

    xp = jnp.pad(x.astype(jnp.bfloat16), ((0, 0), (1, 1), (1, 1), (0, 0)))
    xf = jnp.pad(xp.reshape(N, P, C), ((0, 0), (0, P_alloc - P), (0, 0)))
    w9 = jnp.transpose(w, (2, 3, 1, 0)).reshape(9, C, Co).astype(jnp.bfloat16)

    out = pl.pallas_call(
        functools.partial(_conv3x3_s1_kernel, wp=Wp, rows=rows, act=act),
        grid=(N,),
        in_specs=[
            pl.BlockSpec((1, P_alloc, C), lambda n: (n, 0, 0)),
            pl.BlockSpec((9, C, Co), lambda n: (0, 0, 0)),
            pl.BlockSpec((1, Co), lambda n: (0, 0)),
            pl.BlockSpec((1, Co), lambda n: (0, 0)),
        ],
        out_specs=pl.BlockSpec((1, rows, Co), lambda n: (n, 0, 0)),
        out_shape=jax.ShapeDtypeStruct((N, rows, Co), out_dtype),
        compiler_params=pltpu.CompilerParams(
            dimension_semantics=("parallel",),
            vmem_limit_bytes=VMEM_LIMIT),
    )(xf, w9, s, t)
    return out.reshape(N, H, Wp, Co)[:, :, :W, :]


def _max_reduce_kernel(x_ref, o_ref):
    o_ref[...] = jnp.max(x_ref[...], axis=0)


def _avg_reduce_kernel(x_ref, o_ref):
    o_ref[...] = jnp.mean(x_ref[...].astype(jnp.float32), axis=1)


# ------------------------------- JAX glue ---------------------------------

def im2col(x, kh, kw, stride, pad):
    """(N,H,W,C) -> bf16 patches (N*Ho*Wo, kh*kw*C).  Only used for the 7x7
    stem conv and the three stride-2 3x3 convs."""
    N, H, W, C = x.shape
    xb = x.astype(jnp.bfloat16)
    if pad:
        xb = jnp.pad(xb, ((0, 0), (pad, pad), (pad, pad), (0, 0)))
    Hp, Wp = H + 2 * pad, W + 2 * pad
    Ho = (Hp - kh) // stride + 1
    Wo = (Wp - kw) // stride + 1
    taps = [xb[:, dy:dy + stride * (Ho - 1) + 1:stride,
               dx:dx + stride * (Wo - 1) + 1:stride, :]
            for dy in range(kh) for dx in range(kw)]
    patches = jnp.stack(taps, axis=3)                     # (N,Ho,Wo,kh*kw,C)
    return patches.reshape(N * Ho * Wo, kh * kw * C), Ho, Wo


@functools.partial(jax.jit, static_argnames=("stride", "pad", "act", "out_dtype"))
def conv_bn(x, w, bn, res=None, *, stride, pad, act, out_dtype=jnp.float32):
    """Conv2d(bias=False) + BatchNorm2d (eval) + activation (+ fused residual)."""
    cout, cin, kh, kw = w.shape
    N = x.shape[0]
    s, t = bn_scale_shift(bn)
    if kh == 3 and kw == 3 and stride == 1 and pad == 1 and res is None:
        return conv3x3_s1_bn_act(x, w, s, t, act, out_dtype)
    if kh == 1 and kw == 1:
        xs = x[:, ::stride, ::stride, :] if stride > 1 else x
        Ho, Wo = xs.shape[1], xs.shape[2]
        a = xs.reshape(N * Ho * Wo, cin)
        wm = w.reshape(cout, cin).T
    else:
        a, Ho, Wo = im2col(x, kh, kw, stride, pad)
        wm = jnp.transpose(w, (2, 3, 1, 0)).reshape(kh * kw * cin, cout)
    res_flat = None if res is None else res.reshape(N * Ho * Wo, cout)
    y = mm_affine(a, wm, s, t, act=act, res=res_flat, out_dtype=out_dtype)
    return y.reshape(N, Ho, Wo, cout)


@jax.jit
def maxpool_3x3_s2_p1(x):
    # TODO(synk): the stem maxpool still stacks its 9 taps through HBM (tiny,
    # stem-only tensor); the 3x3 convs no longer do.
    N, H, W, C = x.shape
    xp = jnp.pad(x, ((0, 0), (1, 1), (1, 1), (0, 0)), constant_values=-jnp.inf)
    Ho = (H + 2 - 3) // 2 + 1
    Wo = (W + 2 - 3) // 2 + 1
    taps = [xp[:, dy:dy + 2 * (Ho - 1) + 1:2, dx:dx + 2 * (Wo - 1) + 1:2, :]
            for dy in range(3) for dx in range(3)]
    stacked = jnp.stack(taps, axis=0).reshape(9, N * Ho * Wo, C)
    M = N * Ho * Wo
    bm = 256 if M % 256 == 0 else (128 if M % 128 == 0 else M)
    out = pl.pallas_call(
        _max_reduce_kernel,
        grid=(M // bm,),
        in_specs=[pl.BlockSpec((9, bm, C), lambda i: (0, i, 0))],
        out_specs=pl.BlockSpec((bm, C), lambda i: (i, 0)),
        out_shape=jax.ShapeDtypeStruct((M, C), x.dtype),
        compiler_params=pltpu.CompilerParams(
            dimension_semantics=("parallel",),
            vmem_limit_bytes=VMEM_LIMIT),
    )(stacked)
    return out.reshape(N, Ho, Wo, C)


@jax.jit
def global_avgpool(x):                                    # AdaptiveAvgPool2d((1,1))
    N, H, W, C = x.shape
    xr = x.reshape(N, H * W, C)
    bc = 512 if C % 512 == 0 else (128 if C % 128 == 0 else C)
    return pl.pallas_call(
        _avg_reduce_kernel,
        grid=(C // bc,),
        in_specs=[pl.BlockSpec((N, H * W, bc), lambda i: (0, 0, i))],
        out_specs=pl.BlockSpec((N, bc), lambda i: (0, i)),
        out_shape=jax.ShapeDtypeStruct((N, C), jnp.float32),
        compiler_params=pltpu.CompilerParams(
            dimension_semantics=("parallel",),
            vmem_limit_bytes=VMEM_LIMIT),
    )(xr)


def bottleneck(x, p, stride):
    out = conv_bn(x, p["conv1"], p["bn1"], stride=1, pad=0, act="relu",
                  out_dtype=jnp.bfloat16)
    out = conv_bn(out, p["conv2"], p["bn2"], stride=stride, pad=1, act="relu",
                  out_dtype=jnp.bfloat16)
    if "ds_conv" in p:
        idn = conv_bn(x, p["ds_conv"], p["ds_bn"], stride=stride, pad=0, act="none")
    else:
        idn = x
    # conv3 + BN + residual add + ReLU fused in a single matmul epilogue.
    return conv_bn(out, p["conv3"], p["bn3"], idn, stride=1, pad=0, act="relu")


@jax.jit
def classblock_forward(feat, cp):
    # add_block: Linear(3072->512) + BatchNorm1d + LeakyReLU(0.1) [+ Dropout=id]
    s = (cp["bn_gamma"] / jnp.sqrt(cp["bn_var"] + BN_EPS)).reshape(1, -1)
    t = ((cp["fc1_b"] - cp["bn_mean"]) * s[0] + cp["bn_beta"]).reshape(1, -1)
    h = mm_affine(feat, cp["fc1_w"].T, s, t, act="leaky_relu")
    # classifier: Linear(512 -> class_num); output lane-padded to 128 inside
    # mm_affine and sliced back to class_num.
    ones = jnp.ones((1, cp["fc2_b"].shape[0]), jnp.float32)
    return mm_affine(h, cp["fc2_w"].T, ones, cp["fc2_b"].reshape(1, -1), act="none")


def ft_net_middle_forward(params, x_nchw):
    x = jnp.transpose(x_nchw, (0, 2, 3, 1))               # NCHW -> NHWC
    x = conv_bn(x, params["conv1"], params["bn1"], stride=2, pad=3, act="relu")
    x = maxpool_3x3_s2_p1(x)
    layer_strides = (1, 2, 2, 2)
    x0 = None
    for li, blocks in enumerate(params["layers"]):
        for bi, bp in enumerate(blocks):
            s = layer_strides[li] if bi == 0 else 1
            x = bottleneck(x, bp, s)
        if li == 2:                                        # after layer3 (1024 ch)
            x0 = global_avgpool(x)
    x1 = global_avgpool(x)                                 # after layer4 (2048 ch)
    # matches torch.cat((x0_layer3, x1_layer4), 1) + squeeze in the reference
    feat = jnp.concatenate([x0, x1], axis=1)               # (N, 3072)
    return classblock_forward(feat, params["classifier"])


# --------------------------- deterministic params --------------------------

def make_params(class_num):
    rng = np.random.default_rng(0)

    def conv_w(cout, cin, k):
        std = np.sqrt(2.0 / (cin * k * k))                 # kaiming_normal fan_in
        return rng.normal(0.0, std, (cout, cin, k, k)).astype(np.float32)

    def bn_p(c):
        return {"gamma": np.ones(c, np.float32),
                "beta": np.zeros(c, np.float32),
                "mean": rng.normal(0.0, 0.1, c).astype(np.float32),
                "var": rng.uniform(0.5, 1.5, c).astype(np.float32)}

    def block_p(cin, planes, downsample):
        p = {"conv1": conv_w(planes, cin, 1), "bn1": bn_p(planes),
             "conv2": conv_w(planes, planes, 3), "bn2": bn_p(planes),
             "conv3": conv_w(planes * 4, planes, 1), "bn3": bn_p(planes * 4)}
        if downsample:
            p["ds_conv"] = conv_w(planes * 4, cin, 1)
            p["ds_bn"] = bn_p(planes * 4)
        return p

    params = {"conv1": conv_w(64, 3, 7), "bn1": bn_p(64)}
    layers = []
    cin = 64
    for planes, nblocks, stride in [(64, 3, 1), (128, 4, 2), (256, 6, 2), (512, 3, 2)]:
        blocks = []
        for b in range(nblocks):
            s = stride if b == 0 else 1
            ds = (b == 0) and (s != 1 or cin != planes * 4)
            blocks.append(block_p(cin, planes, ds))
            cin = planes * 4
        layers.append(blocks)
    params["layers"] = layers

    in_dim, bneck = 2048 + 1024, 512
    params["classifier"] = {
        # add_block Linear: kaiming_normal fan_out, bias 0
        "fc1_w": rng.normal(0.0, np.sqrt(2.0 / bneck), (bneck, in_dim)).astype(np.float32),
        "fc1_b": np.zeros(bneck, np.float32),
        # BatchNorm1d: weight ~ N(1, 0.02), bias 0, running stats 0 / 1
        "bn_gamma": rng.normal(1.0, 0.02, bneck).astype(np.float32),
        "bn_beta": np.zeros(bneck, np.float32),
        "bn_mean": np.zeros(bneck, np.float32),
        "bn_var": np.ones(bneck, np.float32),
        # classifier Linear: weight ~ N(0, 0.001), bias 0
        "fc2_w": rng.normal(0.0, 0.001, (class_num, bneck)).astype(np.float32),
        "fc2_b": np.zeros(class_num, np.float32),
    }
    return jax.tree_util.tree_map(jnp.asarray, params)


if __name__ == "__main__":
    params = make_params(CLASS_NUM)
    # Small input (batch=2, 3x32x32) keeps every stage valid (layer4 spatial 1x1)
    # while minimising trace/compile/run time.
    x = jax.random.normal(jax.random.PRNGKey(0), (2, 3, 32, 32), jnp.float32)
    logits = ft_net_middle_forward(params, x)
    logits = jax.block_until_ready(logits)
    assert logits.shape == (2, CLASS_NUM), logits.shape
    assert np.all(np.isfinite(np.asarray(logits)))
    print("KERNEL_OK")
</pallas_src>

<mosaic_0001>
module attributes {stable_mosaic.version = 11 : i64} {
  func.func @_mm_affine_kernel(%arg0: i32, %arg1: i32, %arg2: memref<256x256xbf16, #tpu.memory_space<vmem>>, %arg3: memref<256x128xbf16, #tpu.memory_space<vmem>>, %arg4: memref<1x128xf32, #tpu.memory_space<vmem>>, %arg5: memref<1x128xf32, #tpu.memory_space<vmem>>, %arg6: memref<256x128xf32, #tpu.memory_space<vmem>>, %arg7: memref<256x128xf32, #tpu.memory_space<vmem>>) attributes {dimension_semantics = [#tpu.dimension_semantics<parallel>, #tpu.dimension_semantics<arbitrary>], iteration_bounds = array<i64: 2, 1>, scalar_prefetch = 0 : i64, scratch_operands = 1 : i64, tpu.core_type = #tpu.core_type<tc>, window_params = [{transform_indices = @transform_0, window_bounds = array<i64: 256, 256>}, {transform_indices = @transform_1, window_bounds = array<i64: 256, 128>}, {pipeline_mode = #tpu.pipeline_mode<synchronous>, transform_indices = @transform_2, window_bounds = array<i64: 1, 128>}, {pipeline_mode = #tpu.pipeline_mode<synchronous>, transform_indices = @transform_3, window_bounds = array<i64: 1, 128>}, {transform_indices = @transform_4, window_bounds = array<i64: 256, 128>}]} {
    %c0_i32 = arith.constant 0 : i32
    %0 = arith.cmpi eq, %arg1, %c0_i32 : i32
    %1 = arith.extui %0 : i1 to i32
    %c0_i32_0 = arith.constant 0 : i32
    %2 = arith.cmpi ne, %1, %c0_i32_0 : i32
    scf.if %2 {
      %cst_10 = arith.constant 0.000000e+00 : f32
      %12 = vector.broadcast %cst_10 : f32 to vector<256x128xf32>
      %c0_11 = arith.constant 0 : index
      %c0_12 = arith.constant 0 : index
      %13 = vector.load %arg7[%c0_11, %c0_12] : memref<256x128xf32, #tpu.memory_space<vmem>>, vector<256x128xf32>
      tpu.vector_store %arg7[%c0_11, %c0_12], %12 {strides = array<i32>} : memref<256x128xf32, #tpu.memory_space<vmem>>, vector<256x128xf32>,
    } else {
    }
    %c0 = arith.constant 0 : index
    %c0_1 = arith.constant 0 : index
    %3 = vector.load %arg7[%c0, %c0_1] : memref<256x128xf32, #tpu.memory_space<vmem>>, vector<256x128xf32>
    %c0_2 = arith.constant 0 : index
    %c0_3 = arith.constant 0 : index
    %4 = vector.load %arg2[%c0_2, %c0_3] : memref<256x256xbf16, #tpu.memory_space<vmem>>, vector<256x256xbf16>
    %c0_4 = arith.constant 0 : index
    %c0_5 = arith.constant 0 : index
    %5 = vector.load %arg3[%c0_4, %c0_5] : memref<256x128xbf16, #tpu.memory_space<vmem>>, vector<256x128xbf16>
    %cst = arith.constant dense<0.000000e+00> : vector<256x128xf32>
    %6 = tpu.matmul %4, %5, %cst {dimension_numbers = #tpu.dot_dimension_numbers<[1], [0], [0], [1], [0, 0, 1, 1], [], []>} : vector<256x256xbf16>, vector<256x128xbf16>, vector<256x128xf32> -> vector<256x128xf32>
    %7 = arith.addf %3, %6 : vector<256x128xf32>
    %c0_6 = arith.constant 0 : index
    %c0_7 = arith.constant 0 : index
    %8 = vector.load %arg7[%c0_6, %c0_7] : memref<256x128xf32, #tpu.memory_space<vmem>>, vector<256x128xf32>
    tpu.vector_store %arg7[%c0_6, %c0_7], %7 {strides = array<i32>} : memref<256x128xf32, #tpu.memory_space<vmem>>, vector<256x128xf32>,
    %c0_i32_8 = arith.constant 0 : i32
    %9 = arith.cmpi eq, %arg1, %c0_i32_8 : i32
    %10 = arith.extui %9 : i1 to i32
    %c0_i32_9 = arith.constant 0 : i32
    %11 = arith.cmpi ne, %10, %c0_i32_9 : i32
    scf.if %11 {
      %c0_10 = arith.constant 0 : index
      %c0_11 = arith.constant 0 : index
      %12 = vector.load %arg7[%c0_10, %c0_11] : memref<256x128xf32, #tpu.memory_space<vmem>>, vector<256x128xf32>
      %c0_12 = arith.constant 0 : index
      %c0_13 = arith.constant 0 : index
      %13 = vector.load %arg4[%c0_12, %c0_13] : memref<1x128xf32, #tpu.memory_space<vmem>>, vector<1x128xf32>
      %14 = vector.broadcast %13 : vector<1x128xf32> to vector<256x128xf32>
      %15 = arith.mulf %12, %14 : vector<256x128xf32>
      %c0_14 = arith.constant 0 : index
      %c0_15 = arith.constant 0 : index
      %16 = vector.load %arg5[%c0_14, %c0_15] : memref<1x128xf32, #tpu.memory_space<vmem>>, vector<1x128xf32>
      %17 = vector.broadcast %16 : vector<1x128xf32> to vector<256x128xf32>
      %18 = arith.addf %15, %17 : vector<256x128xf32>
      %cst_16 = arith.constant 0.000000e+00 : f32
      %19 = vector.broadcast %cst_16 : f32 to vector<256x128xf32>
      %20 = arith.maximumf %18, %19 : vector<256x128xf32>
      %c0_17 = arith.constant 0 : index
      %c0_18 = arith.constant 0 : index
      %21 = vector.load %arg6[%c0_17, %c0_18] : memref<256x128xf32, #tpu.memory_space<vmem>>, vector<256x128xf32>
      tpu.vector_store %arg6[%c0_17, %c0_18], %20 {strides = array<i32>} : memref<256x128xf32, #tpu.memory_space<vmem>>, vector<256x128xf32>,
    } else {
    }
    return
  }
  func.func @transform_0(%arg0: i32, %arg1: i32) -> (i32, i32) {
    %c0_i32 = arith.constant 0 : i32
    return %arg0, %arg1 : i32, i32
  }
  func.func @transform_1(%arg0: i32, %arg1: i32) -> (i32, i32) {
    %c0_i32 = arith.constant 0 : i32
    %c0_i32_0 = arith.constant 0 : i32
    return %arg1, %c0_i32 : i32, i32
  }
  func.func @transform_2(%arg0: i32, %arg1: i32) -> (i32, i32) {
    %c0_i32 = arith.constant 0 : i32
    %c0_i32_0 = arith.constant 0 : i32
    %c0_i32_1 = arith.constant 0 : i32
    return %c0_i32, %c0_i32_0 : i32, i32
  }
  func.func @transform_3(%arg0: i32, %arg1: i32) -> (i32, i32) {
    %c0_i32 = arith.constant 0 : i32
    %c0_i32_0 = arith.constant 0 : i32
    %c0_i32_1 = arith.constant 0 : i32
    return %c0_i32, %c0_i32_0 : i32, i32
  }
  func.func @transform_4(%arg0: i32, %arg1: i32) -> (i32, i32) {
    %c0_i32 = arith.constant 0 : i32
    %c0_i32_0 = arith.constant 0 : i32
    return %arg0, %c0_i32 : i32, i32
  }
}

</mosaic_0001>

<llo_original>
// kernel: conv_bn.1
$region0: #{conv_bn.1}
  #allocation0 [shape = 'u32[]', space=smem, size = 0x4, offset = 0x4, fixed_abs, tag = 'smem constant byte address 0x4 - core index']
  #allocation1 [shape = 'u32[72,128]{1,0:T(1,128)}', space=vmem, size = 0x9000, scoped, tag = 'internal scratch']
  #allocation2 [shape = 'f32[256,128]{1,0:T(8,128)}', space=vmem, size = 0x20000, scoped, tag = 'scratch operand']
  %s0 = inlined_call_operand.vmem [shape: bf16[512,256], index: 0, kind: input, shape index: {}]
  %s1 = inlined_call_operand.vmem [shape: bf16[256,128], index: 1, kind: input, shape index: {}]
  %s2 = inlined_call_operand.vmem [shape: f32[1,128], index: 2, kind: input, shape index: {}]
  %s3 = inlined_call_operand.vmem [shape: f32[1,128], index: 3, kind: input, shape index: {}]
  %s4 = inlined_call_operand.hbm [shape: f32[512,128], index: 4, kind: output, shape index: {}]
  %s5 = sld [smem:[#allocation0]]
  $region57: #{conv_bn.1} parent=0
    _
  %s7 = ssub.s32 1, %s5
  %s8 = scalar_select 0, %s7, %s5
  $region1: #{conv_bn.1} parent=0
    #allocation3 [shape = 'u8[262144]{0}', space=vmem, size = 0x40000, scoped, tag = 'output window, operand 0']
    #allocation4 [shape = 's32[2]{0}', space=sflag, size = 0x8, scoped, tag = 'scoped memory for conv_bn.1']
    %9 = vsyncpa [#allocation4], 0
    %s10 = scalar_lea.sflag [#allocation4], 1
    %11 = vsyncpa %s10, 0
    loop: start=0, step=1, limit=4
    $region2: #{conv_bn.1} parent=1 // loop_pre_header
      _
    $region3: #{conv_bn.1} parent=1 // loop_header
      %s13 = sphi 0, %s17
      %p14 = scmp.ge.s32.totalorder %s13, 4
      %s20 = sphi 0, %s32
      %s21 = sphi 0, %s28
      %s22 = sphi 0, %s20
      %s23 = sphi 0, %s21
      %s24 = sphi 0, %s22
      %s25 = sphi 0, %s23
      %s37 = sphi 0, %s39
      %s40 = sphi 0, %s37
      %s41 = sphi 0, %s40
      %s57 = sphi 0, %s41
      %s63 = sphi 0, %s65
      %s66 = sphi 0, %s63
      %s67 = sphi 0, %s66
      %s83 = sphi 0, %s67
      %s87 = sphi 0, %s87
      %s89 = sphi 0, %s87
      %s90 = sphi 0, %s89
      %s104 = sphi 0, %s90
      %s108 = sphi 0, %s108
      %s110 = sphi 0, %s108
      %s111 = sphi 0, %s110
      %s125 = sphi 0, %s111
      %s131 = sphi 0, %s133
      %s134 = sphi 0, %s131
      %s135 = sphi 0, %s134
      %s151 = sphi 0, %s135
    $region4: #{conv_bn.1} parent=1 // loop_header_branch
      %16 = sbr.rel (%p14) target = $region8
    $region5: #{conv_bn.1} parent=1 // loop_body
      %s18 = ssub.s32 %s13, 1
      %s19 = ssub.s32 %s13, 2
      %s26 = sadd.s32 1, %s21
      %p27 = scmp.ge.s32.totalorder %s26, 1
      %s28 = scalar_select %p27, 0, %s26
      %s29 = sadd.s32 1, %s20
      %s30 = scalar_select %p27, %s29, %s20
      %p31 = scmp.ge.s32.totalorder %s30, 2
      %s32 = scalar_select %p31, 0, %s30
      %s33 = ssub.s32 %s20, %s32
      %s34 = ssub.s32 %s21, %s28
      %s35 = sor.u32 %s33, %s34
      %p36 = scmp.eq.s32.totalorder %s35, 0
      %s38 = sadd.s32 %s37, 1
      %s39 = scalar_select %p36, %s37, %s38
      %p42 = pneg %p36
      %p43 = scmp.eq.s32.totalorder %s13, 1
      %p44 = por %p42, %p43
      %p45 = scmp.ne.s32.totalorder %s37, %s40
      %p46 = scmp.eq.s32.totalorder %s13, 0
      %p47 = por %p45, %p46
      %p48 = scmp.ne.s32.totalorder %s37, %s40
      %p49 = scmp.eq.s32.totalorder %s18, 1
      %p50 = por %p48, %p49
      %p51 = scmp.ne.s32.totalorder %s40, %s41
      %p52 = scmp.eq.s32.totalorder %s18, 0
      %p53 = por %p51, %p52
      %p54 = scmp.ne.s32.totalorder %s40, %s41
      %p55 = scmp.eq.s32.totalorder %s19, 1
      %p56 = por %p54, %p55
      %p58 = scmp.ne.s32.totalorder %s41, %s57
      %p59 = scmp.eq.s32.totalorder %s19, 0
      %p60 = por %p58, %p59
      %s61 = ssub.s32 %s21, %s28
      %p62 = scmp.eq.s32.totalorder %s61, 0
      %s64 = sadd.s32 %s63, 1
      %s65 = scalar_select %p62, %s63, %s64
      %p68 = pneg %p62
      %p69 = scmp.eq.s32.totalorder %s13, 1
      %p70 = por %p68, %p69
      %p71 = scmp.ne.s32.totalorder %s63, %s66
      %p72 = scmp.eq.s32.totalorder %s13, 0
      %p73 = por %p71, %p72
      %p74 = scmp.ne.s32.totalorder %s63, %s66
      %p75 = scmp.eq.s32.totalorder %s18, 1
      %p76 = por %p74, %p75
      %p77 = scmp.ne.s32.totalorder %s66, %s67
      %p78 = scmp.eq.s32.totalorder %s18, 0
      %p79 = por %p77, %p78
      %p80 = scmp.ne.s32.totalorder %s66, %s67
      %p81 = scmp.eq.s32.totalorder %s19, 1
      %p82 = por %p80, %p81
      %p84 = scmp.ne.s32.totalorder %s67, %s83
      %p85 = scmp.eq.s32.totalorder %s19, 0
      %p86 = por %p84, %p85
      %s88 = sadd.s32 %s87, 1
      %p91 = scmp.eq.s32.totalorder %s13, 1
      %p92 = scmp.ne.s32.totalorder %s87, %s89
      %p93 = scmp.eq.s32.totalorder %s13, 0
      %p94 = por %p92, %p93
      %p95 = scmp.ne.s32.totalorder %s87, %s89
      %p96 = scmp.eq.s32.totalorder %s18, 1
      %p97 = por %p95, %p96
      %p98 = scmp.ne.s32.totalorder %s89, %s90
      %p99 = scmp.eq.s32.totalorder %s18, 0
      %p100 = por %p98, %p99
      %p101 = scmp.ne.s32.totalorder %s89, %s90
      %p102 = scmp.eq.s32.totalorder %s19, 1
      %p103 = por %p101, %p102
      %p105 = scmp.ne.s32.totalorder %s90, %s104
      %p106 = scmp.eq.s32.totalorder %s19, 0
      %p107 = por %p105, %p106
      %s109 = sadd.s32 %s108, 1
      %p112 = scmp.eq.s32.totalorder %s13, 1
      %p113 = scmp.ne.s32.totalorder %s108, %s110
      %p114 = scmp.eq.s32.totalorder %s13, 0
      %p115 = por %p113, %p114
      %p116 = scmp.ne.s32.totalorder %s108, %s110
      %p117 = scmp.eq.s32.totalorder %s18, 1
      %p118 = por %p116, %p117
      %p119 = scmp.ne.s32.totalorder %s110, %s111
      %p120 = scmp.eq.s32.totalorder %s18, 0
      %p121 = por %p119, %p120
      %p122 = scmp.ne.s32.totalorder %s110, %s111
      %p123 = scmp.eq.s32.totalorder %s19, 1
      %p124 = por %p122, %p123
      %p126 = scmp.ne.s32.totalorder %s111, %s125
      %p127 = scmp.eq.s32.totalorder %s19, 0
      %p128 = por %p126, %p127
      %s129 = ssub.s32 %s20, %s32
      %p130 = scmp.eq.s32.totalorder %s129, 0
      %s132 = sadd.s32 %s131, 1
      %s133 = scalar_select %p130, %s131, %s132
      %p136 = pneg %p130
      %p137 = scmp.eq.s32.totalorder %s13, 1
      %p138 = por %p136, %p137
      %p139 = scmp.ne.s32.totalorder %s131, %s134
      %p140 = scmp.eq.s32.totalorder %s13, 0
      %p141 = por %p139, %p140
      %p142 = scmp.ne.s32.totalorder %s131, %s134
      %p143 = scmp.eq.s32.totalorder %s18, 1
      %p144 = por %p142, %p143
      %p145 = scmp.ne.s32.totalorder %s134, %s135
      %p146 = scmp.eq.s32.totalorder %s18, 0
      %p147 = por %p145, %p146
      %p148 = scmp.ne.s32.totalorder %s134, %s135
      %p149 = scmp.eq.s32.totalorder %s19, 1
      %p150 = por %p148, %p149
      %p152 = scmp.ne.s32.totalorder %s135, %s151
      %p153 = scmp.eq.s32.totalorder %s19, 0
      %p154 = por %p152, %p153
      %p155 = scmp.le.s32.totalorder 1, %s13
      %p156 = scmp.lt.s32.totalorder %s13, 3
      %p157 = pnand %p155, %p156
      %p158 = pneg %p157
      // Predicated region
      $region9: #{conv_bn.1} parent=5 // pred_check
        _
      $region10: #{conv_bn.1} parent=5 // pred_check_branch
        %160 = sbr.rel (%p157) target = $region12
      $region11: #{conv_bn.1} parent=5 // pred_region
        %s161 = ssub.s32 %s13, 1
        // Predicated region
        $region13: #{conv_bn.1} parent=11 // pred_check
          %p162 = pneg %p79
        $region14: #{conv_bn.1} parent=11 // pred_check_branch
          %164 = sbr.rel (%p162) target = $region16
        $region15: #{conv_bn.1} parent=11 // pred_region
          %s165 = smul.u32 32, %s23
          %p166 = scmp.lt.s32.totalorder %s165, 31
          %s167 = scalar_select %p166, %s165, 31
          %s168 = smul.addr %s167, 4
          %s169 = scalar_lea.vmem %s1, %s168
          %s170 = smul.u32 32, %s23
        $region16: #{conv_bn.1} parent=11 // pred_fallthru
          _
        // Predicated region
        $region17: #{conv_bn.1} parent=11 // pred_check
          %p171 = pneg %p100
        $region18: #{conv_bn.1} parent=11 // pred_check_branch
          %173 = sbr.rel (%p171) target = $region20
        $region19: #{conv_bn.1} parent=11 // pred_region
          _
        $region20: #{conv_bn.1} parent=11 // pred_fallthru
          _
        // Predicated region
        $region21: #{conv_bn.1} parent=11 // pred_check
          %p174 = pneg %p121
        $region22: #{conv_bn.1} parent=11 // pred_check_branch
          %176 = sbr.rel (%p174) target = $region24
        $region23: #{conv_bn.1} parent=11 // pred_region
          _
        $region24: #{conv_bn.1} parent=11 // pred_fallthru
          _
      $region12: #{conv_bn.1} parent=5 // pred_fallthru
        _
      %p177 = scmp.lt.s32.totalorder %s13, 2
      // Predicated region
      $region25: #{conv_bn.1} parent=5 // pred_check
        %p178 = pneg %p177
      $region26: #{conv_bn.1} parent=5 // pred_check_branch
        %180 = sbr.rel (%p178) target = $region28
      $region27: #{conv_bn.1} parent=5 // pred_region
        // Predicated region
        $region29: #{conv_bn.1} parent=27 // pred_check
          %p181 = pneg %p47
        $region30: #{conv_bn.1} parent=27 // pred_check_branch
          %183 = sbr.rel (%p181) target = $region32
        $region31: #{conv_bn.1} parent=27 // pred_region
          %s184 = smul.u32 32, %s20
          %s185 = smul.u32 2, %s21
          %p186 = scmp.lt.s32.totalorder %s184, 63
          %s187 = scalar_select %p186, %s184, 63
          %p188 = scmp.lt.s32.totalorder %s185, 1
          %s189 = scalar_select %p188, %s185, 1
          %s190 = smul.addr %s187, 2
          %s191 = sadd.s32 %s189, %s190
          %s192 = smul.addr %s191, 4
          %s193 = scalar_lea.vmem %s0, %s192
          %s194 = smul.u32 32, %s20
          %s195 = smul.u32 2, %s21
        $region32: #{conv_bn.1} parent=27 // pred_fallthru
          _
      $region28: #{conv_bn.1} parent=5 // pred_fallthru
        _
      %p196 = scmp.le.s32.totalorder 1, %s13
      %p197 = scmp.lt.s32.totalorder %s13, 3
      %p198 = pnand %p196, %p197
      %p199 = pneg %p198
      // Predicated region
      $region33: #{conv_bn.1} parent=5 // pred_check
        _
      $region34: #{conv_bn.1} parent=5 // pred_check_branch
        %201 = sbr.rel (%p198) target = $region36
      $region35: #{conv_bn.1} parent=5 // pred_region
        %s202 = ssub.s32 %s13, 1
        %s203 = smul.u32 32, %s22
        %s204 = smul.u32 2, %s23
        %p205 = scmp.lt.s32.totalorder %s203, 63
        %s206 = scalar_select %p205, %s203, 63
        %p207 = scmp.lt.s32.totalorder %s204, 1
        %s208 = scalar_select %p207, %s204, 1
        %s209 = smul.addr %s206, 2
        %s210 = sadd.s32 %s208, %s209
        %s211 = smul.addr %s210, 4
        %s212 = scalar_lea.vmem %s0, %s211
        %p213 = pneg %p53
        %p214 = pneg %p50
        %s215 = smul.u32 32, %s23
        %p216 = scmp.lt.s32.totalorder %s215, 31
        %s217 = scalar_select %p216, %s215, 31
        %s218 = smul.addr %s217, 4
        %s219 = scalar_lea.vmem %s1, %s218
        %p220 = pneg %p79
        %p221 = pneg %p76
        %p222 = pneg %p100
        %p223 = pneg %p97
        %p224 = pneg %p121
        %p225 = pneg %p118
        %p226 = pneg %p147
        %p227 = pneg %p144
        %s228 = sand.u32 %s134, 1
        %s229 = scalar_lea.sflag [#allocation4], %s228
        %s230 = sand.u32 %s134, 1
        %s231 = smul.addr %s230, 256
        %s232 = scalar_lea.vmem [#allocation3], %s231
        %s233 = smul.u32 32, %s22
        %s234 = smul.u32 2, %s23
        %p235 = scmp.lt.s32.totalorder %s233, 63
        %s236 = scalar_select %p235, %s233, 63
        %p237 = scmp.lt.s32.totalorder %s234, 1
        %s238 = scalar_select %p237, %s234, 1
        %s239 = smul.addr %s236, 2
        %s240 = sadd.s32 %s238, %s239
        %s241 = smul.addr %s240, 4
        %s242 = scalar_lea.vmem %s0, %s241
        %s243 = smul.u32 32, %s22
        %s244 = smul.u32 2, %s23
        %s245 = smul.u32 32, %s23
        %p246 = scmp.lt.s32.totalorder %s245, 31
        %s247 = scalar_select %p246, %s245, 31
        %s248 = smul.addr %s247, 4
        %s249 = scalar_lea.vmem %s1, %s248
        %s250 = smul.u32 32, %s23
        %s251 = smul.u32 32, %s22
        %p252 = scmp.eq.s32.totalorder %s23, 0
        // Predicated region
        $region37: #{conv_bn.1} parent=35 // pred_check
          %p253 = pneg %p252
        $region38: #{conv_bn.1} parent=35 // pred_check_branch
          %255 = sbr.rel (%p253) target = $region40
        $region39: #{conv_bn.1} parent=35 // pred_region
          %256 = vst [vmem:[#allocation2] sm:$0xff] 0.0
          %257 = vst [vmem:[#allocation2 + $0x8] sm:$0xff] 0.0
          %258 = vst [vmem:[#allocation2 + $0x10] sm:$0xff] 0.0
          %259 = vst [vmem:[#allocation2 + $0x18] sm:$0xff] 0.0
          %260 = vst [vmem:[#allocation2 + $0x20] sm:$0xff] 0.0
          %261 = vst [vmem:[#allocation2 + $0x28] sm:$0xff] 0.0
          %262 = vst [vmem:[#allocation2 + $0x30] sm:$0xff] 0.0
          %263 = vst [vmem:[#allocation2 + $0x38] sm:$0xff] 0.0
          %264 = vst [vmem:[#allocation2 + $0x40] sm:$0xff] 0.0
          %265 = vst [vmem:[#allocation2 + $0x48] sm:$0xff] 0.0
          %266 = vst [vmem:[#allocation2 + $0x50] sm:$0xff] 0.0
          %267 = vst [vmem:[#allocation2 + $0x58] sm:$0xff] 0.0
          %268 = vst [vmem:[#allocation2 + $0x60] sm:$0xff] 0.0
          %269 = vst [vmem:[#allocation2 + $0x68] sm:$0xff] 0.0
          %270 = vst [vmem:[#allocation2 + $0x70] sm:$0xff] 0.0
          %271 = vst [vmem:[#allocation2 + $0x78] sm:$0xff] 0.0
          %272 = vst [vmem:[#allocation2 + $0x80] sm:$0xff] 0.0
          %273 = vst [vmem:[#allocation2 + $0x88] sm:$0xff] 0.0
          %274 = vst [vmem:[#allocation2 + $0x90] sm:$0xff] 0.0
          %275 = vst [vmem:[#allocation2 + $0x98] sm:$0xff] 0.0
          %276 = vst [vmem:[#allocation2 + $0xa0] sm:$0xff] 0.0
          %277 = vst [vmem:[#allocation2 + $0xa8] sm:$0xff] 0.0
          %278 = vst [vmem:[#allocation2 + $0xb0] sm:$0xff] 0.0
          %279 = vst [vmem:[#allocation2 + $0xb8] sm:$0xff] 0.0
          %280 = vst [vmem:[#allocation2 + $0xc0] sm:$0xff] 0.0
          %281 = vst [vmem:[#allocation2 + $0xc8] sm:$0xff] 0.0
          %282 = vst [vmem:[#allocation2 + $0xd0] sm:$0xff] 0.0
          %283 = vst [vmem:[#allocation2 + $0xd8] sm:$0xff] 0.0
          %284 = vst [vmem:[#allocation2 + $0xe0] sm:$0xff] 0.0
          %285 = vst [vmem:[#allocation2 + $0xe8] sm:$0xff] 0.0
          %286 = vst [vmem:[#allocation2 + $0xf0] sm:$0xff] 0.0
          %287 = vst [vmem:[#allocation2 + $0xf8] sm:$0xff] 0.0
        $region40: #{conv_bn.1} parent=35 // pred_fallthru
          _
        %v288 = vld [vmem:[#allocation2] sm:$0xff]
        %v289 = vld [vmem:[#allocation2 + $0x8] sm:$0xff]
        %v290 = vld [vmem:[#allocation2 + $0x10] sm:$0xff]
        %v291 = vld [vmem:[#allocation2 + $0x18] sm:$0xff]
        %v292 = vld [vmem:[#allocation2 + $0x20] sm:$0xff]
        %v293 = vld [vmem:[#allocation2 + $0x28] sm:$0xff]
        %v294 = vld [vmem:[#allocation2 + $0x30] sm:$0xff]
        %v295 = vld [vmem:[#allocation2 + $0x38] sm:$0xff]
        %v296 = vld [vmem:[#allocation2 + $0x40] sm:$0xff]
        %v297 = vld [vmem:[#allocation2 + $0x48] sm:$0xff]
        %v298 = vld [vmem:[#allocation2 + $0x50] sm:$0xff]
        %v299 = vld [vmem:[#allocation2 + $0x58] sm:$0xff]
        %v300 = vld [vmem:[#allocation2 + $0x60] sm:$0xff]
        %v301 = vld [vmem:[#allocation2 + $0x68] sm:$0xff]
        %v302 = vld [vmem:[#allocation2 + $0x70] sm:$0xff]
        %v303 = vld [vmem:[#allocation2 + $0x78] sm:$0xff]
        %v304 = vld [vmem:[#allocation2 + $0x80] sm:$0xff]
        %v305 = vld [vmem:[#allocation2 + $0x88] sm:$0xff]
        %v306 = vld [vmem:[#allocation2 + $0x90] sm:$0xff]
        %v307 = vld [vmem:[#allocation2 + $0x98] sm:$0xff]
        %v308 = vld [vmem:[#allocation2 + $0xa0] sm:$0xff]
        %v309 = vld [vmem:[#allocation2 + $0xa8] sm:$0xff]
        %v310 = vld [vmem:[#allocation2 + $0xb0] sm:$0xff]
        %v311 = vld [vmem:[#allocation2 + $0xb8] sm:$0xff]
        %v312 = vld [vmem:[#allocation2 + $0xc0] sm:$0xff]
        %v313 = vld [vmem:[#allocation2 + $0xc8] sm:$0xff]
        %v314 = vld [vmem:[#allocation2 + $0xd0] sm:$0xff]
        %v315 = vld [vmem:[#allocation2 + $0xd8] sm:$0xff]
        %v316 = vld [vmem:[#allocation2 + $0xe0] sm:$0xff]
        %v317 = vld [vmem:[#allocation2 + $0xe8] sm:$0xff]
        %v318 = vld [vmem:[#allocation2 + $0xf0] sm:$0xff]
        %v319 = vld [vmem:[#allocation2 + $0xf8] sm:$0xff]
        %v320 = vld [vmem:[%s242] sm:$0xff]
        %v321 = vld [vmem:[%s242 + $0x8] sm:$0xff]
        %v322 = vld [vmem:[%s242 + $0x10] sm:$0xff]
        %v323 = vld [vmem:[%s242 + $0x18] sm:$0xff]
        %v324 = vld [vmem:[%s242 + $0x20] sm:$0xff]
        %v325 = vld [vmem:[%s242 + $0x28] sm:$0xff]
        %v326 = vld [vmem:[%s242 + $0x30] sm:$0xff]
        %v327 = vld [vmem:[%s242 + $0x38] sm:$0xff]
        %v328 = vld [vmem:[%s242 + $0x40] sm:$0xff]
        %v329 = vld [vmem:[%s242 + $0x48] sm:$0xff]
        %v330 = vld [vmem:[%s242 + $0x50] sm:$0xff]
        %v331 = vld [vmem:[%s242 + $0x58] sm:$0xff]
        %v332 = vld [vmem:[%s242 + $0x60] sm:$0xff]
        %v333 = vld [vmem:[%s242 + $0x68] sm:$0xff]
        %v334 = vld [vmem:[%s242 + $0x70] sm:$0xff]
        %v335 = vld [vmem:[%s242 + $0x78] sm:$0xff]
        %v336 = vld [vmem:[%s242 + $0x80] sm:$0xff]
        %v337 = vld [vmem:[%s242 + $0x88] sm:$0xff]
        %v338 = vld [vmem:[%s242 + $0x90] sm:$0xff]
        %v339 = vld [vmem:[%s242 + $0x98] sm:$0xff]
        %v340 = vld [vmem:[%s242 + $0xa0] sm:$0xff]
        %v341 = vld [vmem:[%s242 + $0xa8] sm:$0xff]
        %v342 = vld [vmem:[%s242 + $0xb0] sm:$0xff]
        %v343 = vld [vmem:[%s242 + $0xb8] sm:$0xff]
        %v344 = vld [vmem:[%s242 + $0xc0] sm:$0xff]
        %v345 = vld [vmem:[%s242 + $0xc8] sm:$0xff]
        %v346 = vld [vmem:[%s242 + $0xd0] sm:$0xff]
        %v347 = vld [vmem:[%s242 + $0xd8] sm:$0xff]
        %v348 = vld [vmem:[%s242 + $0xe0] sm:$0xff]
        %v349 = vld [vmem:[%s242 + $0xe8] sm:$0xff]
        %v350 = vld [vmem:[%s242 + $0xf0] sm:$0xff]
        %v351 = vld [vmem:[%s242 + $0xf8] sm:$0xff]
        %v352 = vld [vmem:[%s249] sm:$0xf]
        %v353 = vld [vmem:[%s249 + $0x4] sm:$0xf]
        %v354 = vld [vmem:[%s249 + $0x8] sm:$0xf]
        %v355 = vld [vmem:[%s249 + $0xc] sm:$0xf]
        %v356 = vld [vmem:[%s249 + $0x10] sm:$0xf]
        %v357 = vld [vmem:[%s249 + $0x14] sm:$0xf]
        %v358 = vld [vmem:[%s249 + $0x18] sm:$0xf]
        %v359 = vld [vmem:[%s249 + $0x1c] sm:$0xf]
        %v360 = vld [vmem:[%s249 + $0x20] sm:$0xf]
        %v361 = vld [vmem:[%s249 + $0x24] sm:$0xf]
        %v362 = vld [vmem:[%s249 + $0x28] sm:$0xf]
        %v363 = vld [vmem:[%s249 + $0x2c] sm:$0xf]
        %v364 = vld [vmem:[%s249 + $0x30] sm:$0xf]
        %v365 = vld [vmem:[%s249 + $0x34] sm:$0xf]
        %v366 = vld [vmem:[%s249 + $0x38] sm:$0xf]
        %v367 = vld [vmem:[%s249 + $0x3c] sm:$0xf]
        %v368 = vld [vmem:[%s249 + $0x40] sm:$0xf]
        %v369 = vld [vmem:[%s249 + $0x44] sm:$0xf]
        %v370 = vld [vmem:[%s249 + $0x48] sm:$0xf]
        %v371 = vld [vmem:[%s249 + $0x4c] sm:$0xf]
        %v372 = vld [vmem:[%s249 + $0x50] sm:$0xf]
        %v373 = vld [vmem:[%s249 + $0x54] sm:$0xf]
        %v374 = vld [vmem:[%s249 + $0x58] sm:$0xf]
        %v375 = vld [vmem:[%s249 + $0x5c] sm:$0xf]
        %v376 = vld [vmem:[%s249 + $0x60] sm:$0xf]
        %v377 = vld [vmem:[%s249 + $0x64] sm:$0xf]
        %v378 = vld [vmem:[%s249 + $0x68] sm:$0xf]
        %v379 = vld [vmem:[%s249 + $0x6c] sm:$0xf]
        %v380 = vld [vmem:[%s249 + $0x70] sm:$0xf]
        %v381 = vld [vmem:[%s249 + $0x74] sm:$0xf]
        %v382 = vld [vmem:[%s249 + $0x78] sm:$0xf]
        %v383 = vld [vmem:[%s249 + $0x7c] sm:$0xf]
        %v416 = vunpack.c.l.b16 %v320
        %v417 = vunpack.c.h.b16 %v320
        %v418 = vunpack.c.l.b16 %v321
        %v419 = vunpack.c.h.b16 %v321
        %v420 = vunpack.c.l.b16 %v322
        %v421 = vunpack.c.h.b16 %v322
        %v422 = vunpack.c.l.b16 %v323
        %v423 = vunpack.c.h.b16 %v323
        %v424 = vunpack.c.l.b16 %v324
        %v425 = vunpack.c.h.b16 %v324
        %v426 = vunpack.c.l.b16 %v325
        %v427 = vunpack.c.h.b16 %v325
        %v428 = vunpack.c.l.b16 %v326
        %v429 = vunpack.c.h.b16 %v326
        %v430 = vunpack.c.l.b16 %v327
        %v431 = vunpack.c.h.b16 %v327
        %v432 = vunpack.c.l.b16 %v328
        %v433 = vunpack.c.h.b16 %v328
        %v434 = vunpack.c.l.b16 %v329
        %v435 = vunpack.c.h.b16 %v329
        %v436 = vunpack.c.l.b16 %v330
        %v437 = vunpack.c.h.b16 %v330
        %v438 = vunpack.c.l.b16 %v331
        %v439 = vunpack.c.h.b16 %v331
        %v440 = vunpack.c.l.b16 %v332
        %v441 = vunpack.c.h.b16 %v332
        %v442 = vunpack.c.l.b16 %v333
        %v443 = vunpack.c.h.b16 %v333
        %v444 = vunpack.c.l.b16 %v334
        %v445 = vunpack.c.h.b16 %v334
        %v446 = vunpack.c.l.b16 %v335
        %v447 = vunpack.c.h.b16 %v335
        %v448 = vunpack.c.l.b16 %v336
        %v449 = vunpack.c.h.b16 %v336
        %v450 = vunpack.c.l.b16 %v337
        %v451 = vunpack.c.h.b16 %v337
        %v452 = vunpack.c.l.b16 %v338
        %v453 = vunpack.c.h.b16 %v338
        %v454 = vunpack.c.l.b16 %v339
        %v455 = vunpack.c.h.b16 %v339
        %v456 = vunpack.c.l.b16 %v340
        %v457 = vunpack.c.h.b16 %v340
        %v458 = vunpack.c.l.b16 %v341
        %v459 = vunpack.c.h.b16 %v341
        %v460 = vunpack.c.l.b16 %v342
        %v461 = vunpack.c.h.b16 %v342
        %v462 = vunpack.c.l.b16 %v343
        %v463 = vunpack.c.h.b16 %v343
        %v464 = vunpack.c.l.b16 %v344
        %v465 = vunpack.c.h.b16 %v344
        %v466 = vunpack.c.l.b16 %v345
        %v467 = vunpack.c.h.b16 %v345
        %v468 = vunpack.c.l.b16 %v346
        %v469 = vunpack.c.h.b16 %v346
        %v470 = vunpack.c.l.b16 %v347
        %v471 = vunpack.c.h.b16 %v347
        %v472 = vunpack.c.l.b16 %v348
        %v473 = vunpack.c.h.b16 %v348
        %v474 = vunpack.c.l.b16 %v349
        %v475 = vunpack.c.h.b16 %v349
        %v476 = vunpack.c.l.b16 %v350
        %v477 = vunpack.c.h.b16 %v350
        %v478 = vunpack.c.l.b16 %v351
        %v479 = vunpack.c.h.b16 %v351
        %v480 = vpack.c.b16 %v418, %v416
        %v481 = vpack.c.b16 %v419, %v417
        %v482 = vpack.c.b16 %v422, %v420
        %v483 = vpack.c.b16 %v423, %v421
        %v484 = vpack.c.b16 %v426, %v424
        %v485 = vpack.c.b16 %v427, %v425
        %v486 = vpack.c.b16 %v430, %v428
        %v487 = vpack.c.b16 %v431, %v429
        %v488 = vpack.c.b16 %v434, %v432
        %v489 = vpack.c.b16 %v435, %v433
        %v490 = vpack.c.b16 %v438, %v436
        %v491 = vpack.c.b16 %v439, %v437
        %v492 = vpack.c.b16 %v442, %v440
        %v493 = vpack.c.b16 %v443, %v441
        %v494 = vpack.c.b16 %v446, %v444
        %v495 = vpack.c.b16 %v447, %v445
        %v496 = vpack.c.b16 %v450, %v448
        %v497 = vpack.c.b16 %v451, %v449
        %v498 = vpack.c.b16 %v454, %v452
        %v499 = vpack.c.b16 %v455, %v453
        %v500 = vpack.c.b16 %v458, %v456
        %v501 = vpack.c.b16 %v459, %v457
        %v502 = vpack.c.b16 %v462, %v460
        %v503 = vpack.c.b16 %v463, %v461
        %v504 = vpack.c.b16 %v466, %v464
        %v505 = vpack.c.b16 %v467, %v465
        %v506 = vpack.c.b16 %v470, %v468
        %v507 = vpack.c.b16 %v471, %v469
        %v508 = vpack.c.b16 %v474, %v472
        %v509 = vpack.c.b16 %v475, %v473
        %v510 = vpack.c.b16 %v478, %v476
        %v511 = vpack.c.b16 %v479, %v477
        %v576 = vunpack.c.l.b16 %v352
        %v577 = vunpack.c.l.b16 %v353
        %v578 = vunpack.c.l.b16 %v354
        %v579 = vunpack.c.l.b16 %v355
        %v580 = vunpack.c.l.b16 %v356
        %v581 = vunpack.c.l.b16 %v357
        %v582 = vunpack.c.l.b16 %v358
        %v583 = vunpack.c.l.b16 %v359
        %v584 = vunpack.c.l.b16 %v360
        %v585 = vunpack.c.l.b16 %v361
        %v586 = vunpack.c.l.b16 %v362
        %v587 = vunpack.c.l.b16 %v363
        %v588 = vunpack.c.l.b16 %v364
        %v589 = vunpack.c.l.b16 %v365
        %v590 = vunpack.c.l.b16 %v366
        %v591 = vunpack.c.l.b16 %v367
        %v592 = vunpack.c.l.b16 %v368
        %v593 = vunpack.c.l.b16 %v369
        %v594 = vunpack.c.l.b16 %v370
        %v595 = vunpack.c.l.b16 %v371
        %v596 = vunpack.c.l.b16 %v372
        %v597 = vunpack.c.l.b16 %v373
        %v598 = vunpack.c.l.b16 %v374
        %v599 = vunpack.c.l.b16 %v375
        %v600 = vunpack.c.l.b16 %v376
        %v601 = vunpack.c.l.b16 %v377
        %v602 = vunpack.c.l.b16 %v378
        %v603 = vunpack.c.l.b16 %v379
        %v604 = vunpack.c.l.b16 %v380
        %v605 = vunpack.c.l.b16 %v381
        %v606 = vunpack.c.l.b16 %v382
        %v607 = vunpack.c.l.b16 %v383
        %v608 = vpack.c.b16 %v577, %v576
        %v609 = vpack.c.b16 %v579, %v578
        %v610 = vpack.c.b16 %v581, %v580
        %v611 = vpack.c.b16 %v583, %v582
        %v612 = vpack.c.b16 %v585, %v584
        %v613 = vpack.c.b16 %v587, %v586
        %v614 = vpack.c.b16 %v589, %v588
        %v615 = vpack.c.b16 %v591, %v590
        %v616 = vpack.c.b16 %v593, %v592
        %v617 = vpack.c.b16 %v595, %v594
        %v618 = vpack.c.b16 %v597, %v596
        %v619 = vpack.c.b16 %v599, %v598
        %v620 = vpack.c.b16 %v601, %v600
        %v621 = vpack.c.b16 %v603, %v602
        %v622 = vpack.c.b16 %v605, %v604
        %v623 = vpack.c.b16 %v607, %v606
        %640 = vmatpush.bf16.msra.mxu0 %v615
        %641 = vmatpush.bf16.msra.mxu0 %v614
        %642 = vmatpush.bf16.msra.mxu0 %v613
        %643 = vmatpush.bf16.msra.mxu0 %v612
        %644 = vmatpush.bf16.msra.mxu0 %v611
        %645 = vmatpush.bf16.msra.mxu0 %v610
        %646 = vmatpush.bf16.msra.mxu0 %v609
        %647 = vmatpush.bf16.msra.mxu0 %v608
        %648 = vmatmul.bf16.gmra.mxu0 %v480
        %v649 = vpop.f32.mrf.mxu0
        %v650 = vadd.f32 0.0, %v649
        %v651 = vpop.f32.mrf.mxu0
        %v652 = vadd.f32 0.0, %v651
        %653 = vmatmul.bf16.gmra.mxu0 %v482
        %v654 = vpop.f32.mrf.mxu0
        %v655 = vadd.f32 0.0, %v654
        %v656 = vpop.f32.mrf.mxu0
        %v657 = vadd.f32 0.0, %v656
        %658 = vmatmul.bf16.gmra.mxu0 %v484
        %v659 = vpop.f32.mrf.mxu0
        %v660 = vadd.f32 0.0, %v659
        %v661 = vpop.f32.mrf.mxu0
        %v662 = vadd.f32 0.0, %v661
        %663 = vmatmul.bf16.gmra.mxu0 %v486
        %v664 = vpop.f32.mrf.mxu0
        %v665 = vadd.f32 0.0, %v664
        %v666 = vpop.f32.mrf.mxu0
        %v667 = vadd.f32 0.0, %v666
        %668 = vmatmul.bf16.gmra.mxu0 %v488
        %v669 = vpop.f32.mrf.mxu0
        %v670 = vadd.f32 0.0, %v669
        %v671 = vpop.f32.mrf.mxu0
        %v672 = vadd.f32 0.0, %v671
        %673 = vmatmul.bf16.gmra.mxu0 %v490
        %v674 = vpop.f32.mrf.mxu0
        %v675 = vadd.f32 0.0, %v674
        %v676 = vpop.f32.mrf.mxu0
        %v677 = vadd.f32 0.0, %v676
        %678 = vmatmul.bf16.gmra.mxu0 %v492
        %v679 = vpop.f32.mrf.mxu0
        %v680 = vadd.f32 0.0, %v679
        %v681 = vpop.f32.mrf.mxu0
        %v682 = vadd.f32 0.0, %v681
        %683 = vmatmul.bf16.gmra.mxu0 %v494
        %v684 = vpop.f32.mrf.mxu0
        %v685 = vadd.f32 0.0, %v684
        %v686 = vpop.f32.mrf.mxu0
        %v687 = vadd.f32 0.0, %v686
        %688 = vmatmul.bf16.gmra.mxu0 %v496
        %v689 = vpop.f32.mrf.mxu0
        %v690 = vadd.f32 0.0, %v689
        %v691 = vpop.f32.mrf.mxu0
        %v692 = vadd.f32 0.0, %v691
        %693 = vmatmul.bf16.gmra.mxu0 %v498
        %v694 = vpop.f32.mrf.mxu0
        %v695 = vadd.f32 0.0, %v694
        %v696 = vpop.f32.mrf.mxu0
        %v697 = vadd.f32 0.0, %v696
        %698 = vmatmul.bf16.gmra.mxu0 %v500
        %v699 = vpop.f32.mrf.mxu0
        %v700 = vadd.f32 0.0, %v699
        %v701 = vpop.f32.mrf.mxu0
        %v702 = vadd.f32 0.0, %v701
        %703 = vmatmul.bf16.gmra.mxu0 %v502
        %v704 = vpop.f32.mrf.mxu0
        %v705 = vadd.f32 0.0, %v704
        %v706 = vpop.f32.mrf.mxu0
        %v707 = vadd.f32 0.0, %v706
        %708 = vmatmul.bf16.gmra.mxu0 %v504
        %v709 = vpop.f32.mrf.mxu0
        %v710 = vadd.f32 0.0, %v709
        %v711 = vpop.f32.mrf.mxu0
        %v712 = vadd.f32 0.0, %v711
        %713 = vmatmul.bf16.gmra.mxu0 %v506
        %v714 = vpop.f32.mrf.mxu0
        %v715 = vadd.f32 0.0, %v714
        %v716 = vpop.f32.mrf.mxu0
        %v717 = vadd.f32 0.0, %v716
        %718 = vmatmul.bf16.gmra.mxu0 %v508
        %v719 = vpop.f32.mrf.mxu0
        %v720 = vadd.f32 0.0, %v719
        %v721 = vpop.f32.mrf.mxu0
        %v722 = vadd.f32 0.0, %v721
        %723 = vmatmul.bf16.gmra.mxu0 %v510
        %v724 = vpop.f32.mrf.mxu0
        %v725 = vadd.f32 0.0, %v724
        %v726 = vpop.f32.mrf.mxu0
        %v727 = vadd.f32 0.0, %v726
        %728 = vdwg.mxu0
        %729 = vmatpush.bf16.msra.mxu0 %v623
        %730 = vmatpush.bf16.msra.mxu0 %v622
        %731 = vmatpush.bf16.msra.mxu0 %v621
        %732 = vmatpush.bf16.msra.mxu0 %v620
        %733 = vmatpush.bf16.msra.mxu0 %v619
        %734 = vmatpush.bf16.msra.mxu0 %v618
        %735 = vmatpush.bf16.msra.mxu0 %v617
        %736 = vmatpush.bf16.msra.mxu0 %v616
        %737 = vmatmul.bf16.gmra.mxu0 %v481
        %v738 = vpop.f32.mrf.mxu0
        %v739 = vadd.f32 %v650, %v738
        %v740 = vpop.f32.mrf.mxu0
        %v741 = vadd.f32 %v652, %v740
        %742 = vmatmul.bf16.gmra.mxu0 %v483
        %v743 = vpop.f32.mrf.mxu0
        %v744 = vadd.f32 %v655, %v743
        %v745 = vpop.f32.mrf.mxu0
        %v746 = vadd.f32 %v657, %v745
        %747 = vmatmul.bf16.gmra.mxu0 %v485
        %v748 = vpop.f32.mrf.mxu0
        %v749 = vadd.f32 %v660, %v748
        %v750 = vpop.f32.mrf.mxu0
        %v751 = vadd.f32 %v662, %v750
        %752 = vmatmul.bf16.gmra.mxu0 %v487
        %v753 = vpop.f32.mrf.mxu0
        %v754 = vadd.f32 %v665, %v753
        %v755 = vpop.f32.mrf.mxu0
        %v756 = vadd.f32 %v667, %v755
        %757 = vmatmul.bf16.gmra.mxu0 %v489
        %v758 = vpop.f32.mrf.mxu0
        %v759 = vadd.f32 %v670, %v758
        %v760 = vpop.f32.mrf.mxu0
        %v761 = vadd.f32 %v672, %v760
        %762 = vmatmul.bf16.gmra.mxu0 %v491
        %v763 = vpop.f32.mrf.mxu0
        %v764 = vadd.f32 %v675, %v763
        %v765 = vpop.f32.mrf.mxu0
        %v766 = vadd.f32 %v677, %v765
        %767 = vmatmul.bf16.gmra.mxu0 %v493
        %v768 = vpop.f32.mrf.mxu0
        %v769 = vadd.f32 %v680, %v768
        %v770 = vpop.f32.mrf.mxu0
        %v771 = vadd.f32 %v682, %v770
        %772 = vmatmul.bf16.gmra.mxu0 %v495
        %v773 = vpop.f32.mrf.mxu0
        %v774 = vadd.f32 %v685, %v773
        %v775 = vpop.f32.mrf.mxu0
        %v776 = vadd.f32 %v687, %v775
        %777 = vmatmul.bf16.gmra.mxu0 %v497
        %v778 = vpop.f32.mrf.mxu0
        %v779 = vadd.f32 %v690, %v778
        %v780 = vpop.f32.mrf.mxu0
        %v781 = vadd.f32 %v692, %v780
        %782 = vmatmul.bf16.gmra.mxu0 %v499
        %v783 = vpop.f32.mrf.mxu0
        %v784 = vadd.f32 %v695, %v783
        %v785 = vpop.f32.mrf.mxu0
        %v786 = vadd.f32 %v697, %v785
        %787 = vmatmul.bf16.gmra.mxu0 %v501
        %v788 = vpop.f32.mrf.mxu0
        %v789 = vadd.f32 %v700, %v788
        %v790 = vpop.f32.mrf.mxu0
        %v791 = vadd.f32 %v702, %v790
        %792 = vmatmul.bf16.gmra.mxu0 %v503
        %v793 = vpop.f32.mrf.mxu0
        %v794 = vadd.f32 %v705, %v793
        %v795 = vpop.f32.mrf.mxu0
        %v796 = vadd.f32 %v707, %v795
        %797 = vmatmul.bf16.gmra.mxu0 %v505
        %v798 = vpop.f32.mrf.mxu0
        %v799 = vadd.f32 %v710, %v798
        %v800 = vpop.f32.mrf.mxu0
        %v801 = vadd.f32 %v712, %v800
        %802 = vmatmul.bf16.gmra.mxu0 %v507
        %v803 = vpop.f32.mrf.mxu0
        %v804 = vadd.f32 %v715, %v803
        %v805 = vpop.f32.mrf.mxu0
        %v806 = vadd.f32 %v717, %v805
        %807 = vmatmul.bf16.gmra.mxu0 %v509
        %v808 = vpop.f32.mrf.mxu0
        %v809 = vadd.f32 %v720, %v808
        %v810 = vpop.f32.mrf.mxu0
        %v811 = vadd.f32 %v722, %v810
        %812 = vmatmul.bf16.gmra.mxu0 %v511
        %v813 = vpop.f32.mrf.mxu0
        %v814 = vadd.f32 %v725, %v813
        %v815 = vpop.f32.mrf.mxu0
        %v816 = vadd.f32 %v727, %v815
        %817 = vdwg.mxu0
        %v818 = vadd.f32 %v288, %v739
        %v819 = vadd.f32 %v289, %v741
        %v820 = vadd.f32 %v290, %v744
        %v821 = vadd.f32 %v291, %v746
        %v822 = vadd.f32 %v292, %v749
        %v823 = vadd.f32 %v293, %v751
        %v824 = vadd.f32 %v294, %v754
        %v825 = vadd.f32 %v295, %v756
        %v826 = vadd.f32 %v296, %v759
        %v827 = vadd.f32 %v297, %v761
        %v828 = vadd.f32 %v298, %v764
        %v829 = vadd.f32 %v299, %v766
        %v830 = vadd.f32 %v300, %v769
        %v831 = vadd.f32 %v301, %v771
        %v832 = vadd.f32 %v302, %v774
        %v833 = vadd.f32 %v303, %v776
        %v834 = vadd.f32 %v304, %v779
        %v835 = vadd.f32 %v305, %v781
        %v836 = vadd.f32 %v306, %v784
        %v837 = vadd.f32 %v307, %v786
        %v838 = vadd.f32 %v308, %v789
        %v839 = vadd.f32 %v309, %v791
        %v840 = vadd.f32 %v310, %v794
        %v841 = vadd.f32 %v311, %v796
        %v842 = vadd.f32 %v312, %v799
        %v843 = vadd.f32 %v313, %v801
        %v844 = vadd.f32 %v314, %v804
        %v845 = vadd.f32 %v315, %v806
        %v846 = vadd.f32 %v316, %v809
        %v847 = vadd.f32 %v317, %v811
        %v848 = vadd.f32 %v318, %v814
        %v849 = vadd.f32 %v319, %v816
        %850 = vst [vmem:[#allocation2] sm:$0xff] %v818
        %851 = vst [vmem:[#allocation2 + $0x8] sm:$0xff] %v819
        %852 = vst [vmem:[#allocation2 + $0x10] sm:$0xff] %v820
        %853 = vst [vmem:[#allocation2 + $0x18] sm:$0xff] %v821
        %854 = vst [vmem:[#allocation2 + $0x20] sm:$0xff] %v822
        %855 = vst [vmem:[#allocation2 + $0x28] sm:$0xff] %v823
        %856 = vst [vmem:[#allocation2 + $0x30] sm:$0xff] %v824
        %857 = vst [vmem:[#allocation2 + $0x38] sm:$0xff] %v825
        %858 = vst [vmem:[#allocation2 + $0x40] sm:$0xff] %v826
        %859 = vst [vmem:[#allocation2 + $0x48] sm:$0xff] %v827
        %860 = vst [vmem:[#allocation2 + $0x50] sm:$0xff] %v828
        %861 = vst [vmem:[#allocation2 + $0x58] sm:$0xff] %v829
        %862 = vst [vmem:[#allocation2 + $0x60] sm:$0xff] %v830
        %863 = vst [vmem:[#allocation2 + $0x68] sm:$0xff] %v831
        %864 = vst [vmem:[#allocation2 + $0x70] sm:$0xff] %v832
        %865 = vst [vmem:[#allocation2 + $0x78] sm:$0xff] %v833
        %866 = vst [vmem:[#allocation2 + $0x80] sm:$0xff] %v834
        %867 = vst [vmem:[#allocation2 + $0x88] sm:$0xff] %v835
        %868 = vst [vmem:[#allocation2 + $0x90] sm:$0xff] %v836
        %869 = vst [vmem:[#allocation2 + $0x98] sm:$0xff] %v837
        %870 = vst [vmem:[#allocation2 + $0xa0] sm:$0xff] %v838
        %871 = vst [vmem:[#allocation2 + $0xa8] sm:$0xff] %v839
        %872 = vst [vmem:[#allocation2 + $0xb0] sm:$0xff] %v840
        %873 = vst [vmem:[#allocation2 + $0xb8] sm:$0xff] %v841
        %874 = vst [vmem:[#allocation2 + $0xc0] sm:$0xff] %v842
        %875 = vst [vmem:[#allocation2 + $0xc8] sm:$0xff] %v843
        %876 = vst [vmem:[#allocation2 + $0xd0] sm:$0xff] %v844
        %877 = vst [vmem:[#allocation2 + $0xd8] sm:$0xff] %v845
        %878 = vst [vmem:[#allocation2 + $0xe0] sm:$0xff] %v846
        %879 = vst [vmem:[#allocation2 + $0xe8] sm:$0xff] %v847
        %880 = vst [vmem:[#allocation2 + $0xf0] sm:$0xff] %v848
        %881 = vst [vmem:[#allocation2 + $0xf8] sm:$0xff] %v849
        // Predicated region
        $region41: #{conv_bn.1} parent=35 // pred_check
          %p882 = pneg %p252
        $region42: #{conv_bn.1} parent=35 // pred_check_branch
          %884 = sbr.rel (%p882) target = $region44
        $region43: #{conv_bn.1} parent=35 // pred_region
          %v885 = vld [vmem:[#allocation2] sm:$0xff]
          %v886 = vld [vmem:[#allocation2 + $0x8] sm:$0xff]
          %v887 = vld [vmem:[#allocation2 + $0x10] sm:$0xff]
          %v888 = vld [vmem:[#allocation2 + $0x18] sm:$0xff]
          %v889 = vld [vmem:[#allocation2 + $0x20] sm:$0xff]
          %v890 = vld [vmem:[#allocation2 + $0x28] sm:$0xff]
          %v891 = vld [vmem:[#allocation2 + $0x30] sm:$0xff]
          %v892 = vld [vmem:[#allocation2 + $0x38] sm:$0xff]
          %v893 = vld [vmem:[#allocation2 + $0x40] sm:$0xff]
          %v894 = vld [vmem:[#allocation2 + $0x48] sm:$0xff]
          %v895 = vld [vmem:[#allocation2 + $0x50] sm:$0xff]
          %v896 = vld [vmem:[#allocation2 + $0x58] sm:$0xff]
          %v897 = vld [vmem:[#allocation2 + $0x60] sm:$0xff]
          %v898 = vld [vmem:[#allocation2 + $0x68] sm:$0xff]
          %v899 = vld [vmem:[#allocation2 + $0x70] sm:$0xff]
          %v900 = vld [vmem:[#allocation2 + $0x78] sm:$0xff]
          %v901 = vld [vmem:[#allocation2 + $0x80] sm:$0xff]
          %v902 = vld [vmem:[#allocation2 + $0x88] sm:$0xff]
          %v903 = vld [vmem:[#allocation2 + $0x90] sm:$0xff]
          %v904 = vld [vmem:[#allocation2 + $0x98] sm:$0xff]
          %v905 = vld [vmem:[#allocation2 + $0xa0] sm:$0xff]
          %v906 = vld [vmem:[#allocation2 + $0xa8] sm:$0xff]
          %v907 = vld [vmem:[#allocation2 + $0xb0] sm:$0xff]
          %v908 = vld [vmem:[#allocation2 + $0xb8] sm:$0xff]
          %v909 = vld [vmem:[#allocation2 + $0xc0] sm:$0xff]
          %v910 = vld [vmem:[#allocation2 + $0xc8] sm:$0xff]
          %v911 = vld [vmem:[#allocation2 + $0xd0] sm:$0xff]
          %v912 = vld [vmem:[#allocation2 + $0xd8] sm:$0xff]
          %v913 = vld [vmem:[#allocation2 + $0xe0] sm:$0xff]
          %v914 = vld [vmem:[#allocation2 + $0xe8] sm:$0xff]
          %v915 = vld [vmem:[#allocation2 + $0xf0] sm:$0xff]
          %v916 = vld [vmem:[#allocation2 + $0xf8] sm:$0xff]
          %v917 = vld [vmem:[%s2] sm:$0x1]
          %v919 = vperm.slane %v917, 0
          %v921 = vmul.f32 %v885, %v919
          %v922 = vmul.f32 %v886, %v919
          %v923 = vmul.f32 %v887, %v919
          %v924 = vmul.f32 %v888, %v919
          %v925 = vmul.f32 %v889, %v919
          %v926 = vmul.f32 %v890, %v919
          %v927 = vmul.f32 %v891, %v919
          %v928 = vmul.f32 %v892, %v919
          %v929 = vmul.f32 %v893, %v919
          %v930 = vmul.f32 %v894, %v919
          %v931 = vmul.f32 %v895, %v919
          %v932 = vmul.f32 %v896, %v919
          %v933 = vmul.f32 %v897, %v919
          %v934 = vmul.f32 %v898, %v919
          %v935 = vmul.f32 %v899, %v919
          %v936 = vmul.f32 %v900, %v919
          %v937 = vmul.f32 %v901, %v919
          %v938 = vmul.f32 %v902, %v919
          %v939 = vmul.f32 %v903, %v919
          %v940 = vmul.f32 %v904, %v919
          %v941 = vmul.f32 %v905, %v919
          %v942 = vmul.f32 %v906, %v919
          %v943 = vmul.f32 %v907, %v919
          %v944 = vmul.f32 %v908, %v919
          %v945 = vmul.f32 %v909, %v919
          %v946 = vmul.f32 %v910, %v919
          %v947 = vmul.f32 %v911, %v919
          %v948 = vmul.f32 %v912, %v919
          %v949 = vmul.f32 %v913, %v919
          %v950 = vmul.f32 %v914, %v919
          %v951 = vmul.f32 %v915, %v919
          %v952 = vmul.f32 %v916, %v919
          %v953 = vld [vmem:[%s3] sm:$0x1]
          %v955 = vperm.slane %v953, 0
          %v957 = vadd.f32 %v921, %v955
          %v958 = vadd.f32 %v922, %v955
          %v959 = vadd.f32 %v923, %v955
          %v960 = vadd.f32 %v924, %v955
          %v961 = vadd.f32 %v925, %v955
          %v962 = vadd.f32 %v926, %v955
          %v963 = vadd.f32 %v927, %v955
          %v964 = vadd.f32 %v928, %v955
          %v965 = vadd.f32 %v929, %v955
          %v966 = vadd.f32 %v930, %v955
          %v967 = vadd.f32 %v931, %v955
          %v968 = vadd.f32 %v932, %v955
          %v969 = vadd.f32 %v933, %v955
          %v970 = vadd.f32 %v934, %v955
          %v971 = vadd.f32 %v935, %v955
          %v972 = vadd.f32 %v936, %v955
          %v973 = vadd.f32 %v937, %v955
          %v974 = vadd.f32 %v938, %v955
          %v975 = vadd.f32 %v939, %v955
          %v976 = vadd.f32 %v940, %v955
          %v977 = vadd.f32 %v941, %v955
          %v978 = vadd.f32 %v942, %v955
          %v979 = vadd.f32 %v943, %v955
          %v980 = vadd.f32 %v944, %v955
          %v981 = vadd.f32 %v945, %v955
          %v982 = vadd.f32 %v946, %v955
          %v983 = vadd.f32 %v947, %v955
          %v984 = vadd.f32 %v948, %v955
          %v985 = vadd.f32 %v949, %v955
          %v986 = vadd.f32 %v950, %v955
          %v987 = vadd.f32 %v951, %v955
          %v988 = vadd.f32 %v952, %v955
          %v989 = vmax.f32 %v957, 0.0
          %v990 = vmax.f32 %v958, 0.0
          %v991 = vmax.f32 %v959, 0.0
          %v992 = vmax.f32 %v960, 0.0
          %v993 = vmax.f32 %v961, 0.0
          %v994 = vmax.f32 %v962, 0.0
          %v995 = vmax.f32 %v963, 0.0
          %v996 = vmax.f32 %v964, 0.0
          %v997 = vmax.f32 %v965, 0.0
          %v998 = vmax.f32 %v966, 0.0
          %v999 = vmax.f32 %v967, 0.0
          %v1000 = vmax.f32 %v968, 0.0
          %v1001 = vmax.f32 %v969, 0.0
          %v1002 = vmax.f32 %v970, 0.0
          %v1003 = vmax.f32 %v971, 0.0
          %v1004 = vmax.f32 %v972, 0.0
          %v1005 = vmax.f32 %v973, 0.0
          %v1006 = vmax.f32 %v974, 0.0
          %v1007 = vmax.f32 %v975, 0.0
          %v1008 = vmax.f32 %v976, 0.0
          %v1009 = vmax.f32 %v977, 0.0
          %v1010 = vmax.f32 %v978, 0.0
          %v1011 = vmax.f32 %v979, 0.0
          %v1012 = vmax.f32 %v980, 0.0
          %v1013 = vmax.f32 %v981, 0.0
          %v1014 = vmax.f32 %v982, 0.0
          %v1015 = vmax.f32 %v983, 0.0
          %v1016 = vmax.f32 %v984, 0.0
          %v1017 = vmax.f32 %v985, 0.0
          %v1018 = vmax.f32 %v986, 0.0
          %v1019 = vmax.f32 %v987, 0.0
          %v1020 = vmax.f32 %v988, 0.0
          %1021 = vst [vmem:[%s232] sm:$0xff] %v989
          %1022 = vst [vmem:[%s232 + $0x8] sm:$0xff] %v990
          %1023 = vst [vmem:[%s232 + $0x10] sm:$0xff] %v991
          %1024 = vst [vmem:[%s232 + $0x18] sm:$0xff] %v992
          %1025 = vst [vmem:[%s232 + $0x20] sm:$0xff] %v993
          %1026 = vst [vmem:[%s232 + $0x28] sm:$0xff] %v994
          %1027 = vst [vmem:[%s232 + $0x30] sm:$0xff] %v995
          %1028 = vst [vmem:[%s232 + $0x38] sm:$0xff] %v996
          %1029 = vst [vmem:[%s232 + $0x40] sm:$0xff] %v997
          %1030 = vst [vmem:[%s232 + $0x48] sm:$0xff] %v998
          %1031 = vst [vmem:[%s232 + $0x50] sm:$0xff] %v999
          %1032 = vst [vmem:[%s232 + $0x58] sm:$0xff] %v1000
          %1033 = vst [vmem:[%s232 + $0x60] sm:$0xff] %v1001
          %1034 = vst [vmem:[%s232 + $0x68] sm:$0xff] %v1002
          %1035 = vst [vmem:[%s232 + $0x70] sm:$0xff] %v1003
          %1036 = vst [vmem:[%s232 + $0x78] sm:$0xff] %v1004
          %1037 = vst [vmem:[%s232 + $0x80] sm:$0xff] %v1005
          %1038 = vst [vmem:[%s232 + $0x88] sm:$0xff] %v1006
          %1039 = vst [vmem:[%s232 + $0x90] sm:$0xff] %v1007
          %1040 = vst [vmem:[%s232 + $0x98] sm:$0xff] %v1008
          %1041 = vst [vmem:[%s232 + $0xa0] sm:$0xff] %v1009
          %1042 = vst [vmem:[%s232 + $0xa8] sm:$0xff] %v1010
          %1043 = vst [vmem:[%s232 + $0xb0] sm:$0xff] %v1011
          %1044 = vst [vmem:[%s232 + $0xb8] sm:$0xff] %v1012
          %1045 = vst [vmem:[%s232 + $0xc0] sm:$0xff] %v1013
          %1046 = vst [vmem:[%s232 + $0xc8] sm:$0xff] %v1014
          %1047 = vst [vmem:[%s232 + $0xd0] sm:$0xff] %v1015
          %1048 = vst [vmem:[%s232 + $0xd8] sm:$0xff] %v1016
          %1049 = vst [vmem:[%s232 + $0xe0] sm:$0xff] %v1017
          %1050 = vst [vmem:[%s232 + $0xe8] sm:$0xff] %v1018
          %1051 = vst [vmem:[%s232 + $0xf0] sm:$0xff] %v1019
          %1052 = vst [vmem:[%s232 + $0xf8] sm:$0xff] %v1020
        $region44: #{conv_bn.1} parent=35 // pred_fallthru
          _
        %s1053 = sand.u32 %s134, 1
        %s1054 = scalar_lea.sflag [#allocation4], %s1053
        %s1055 = sand.u32 %s134, 1
        %s1056 = smul.addr %s1055, 256
        %s1057 = scalar_lea.vmem [#allocation3], %s1056
        // Predicated region
        $region45: #{conv_bn.1} parent=35 // pred_check
          %p1058 = pneg %p144
        $region46: #{conv_bn.1} parent=35 // pred_check_branch
          %1060 = sbr.rel (%p1058) target = $region48
        $region47: #{conv_bn.1} parent=35 // pred_region
          %s1061 = smul.u32 32, %s22
          %1063 = vsyncadd %s1054, 0
          %s1064 = smul.addr %s1061, 8
          %s1065 = scalar_lea.hbm %s4, %s1064
          %s1066 = sshll.u32 %s1057, 4
          %s1067 = int_to_ptr.vmem [resolvable:$true] %s1066
          %s1068 = sshll.u32 %s1065, 4
          %s1069 = int_to_ptr.hbm [resolvable:$true] %s1068
          %1074 = dma.vmem_to_hbm [thread:$0]  %s1067, 4096, %s1069, %s1054, 128, 128, 8
        $region48: #{conv_bn.1} parent=35 // pred_fallthru
          _
      $region36: #{conv_bn.1} parent=5 // pred_fallthru
        _
      %p1075 = scmp.le.s32.totalorder 2, %s13
      // Predicated region
      $region49: #{conv_bn.1} parent=5 // pred_check
        %p1076 = pneg %p1075
      $region50: #{conv_bn.1} parent=5 // pred_check_branch
        %1078 = sbr.rel (%p1076) target = $region52
      $region51: #{conv_bn.1} parent=5 // pred_region
        %s1079 = ssub.s32 %s13, 2
        // Predicated region
        $region53: #{conv_bn.1} parent=51 // pred_check
          %p1080 = pneg %p150
        $region54: #{conv_bn.1} parent=51 // pred_check_branch
          %1082 = sbr.rel (%p1080) target = $region56
        $region55: #{conv_bn.1} parent=51 // pred_region
          %s1083 = sand.u32 %s135, 1
          %s1084 = scalar_lea.sflag [#allocation4], %s1083
          %s1085 = sand.u32 %s135, 1
          %s1086 = smul.addr %s1085, 256
          %s1087 = scalar_lea.vmem [#allocation3], %s1086
          %1089 = dma.done %s1084, 4096
        $region56: #{conv_bn.1} parent=51 // pred_fallthru
          _
      $region52: #{conv_bn.1} parent=5 // pred_fallthru
        _
    $region6: #{conv_bn.1} parent=1 // loop_footer
      %s17 = sadd.s32 1, %s13
    $region7: #{conv_bn.1} parent=1 // loop_footer_branch
      %12 = sbr.rel target = $region3
    $region8: #{conv_bn.1} parent=1 // loop_exit
      _
    %1090 = vsyncpa [#allocation4], 1
    %s1091 = scalar_lea.sflag [#allocation4], 1
    %1092 = vsyncpa %s1091, 1

</llo_original>
